<compile_context>
chip_gen: v5e
topology: v5e:2x2
jax: 0.10.0
libtpu: 0.0.40
codegen_flags: <defaults>
</compile_context>

<pallas_src>
import functools
import math

import jax
import jax.numpy as jnp
from jax.experimental import pallas as pl
from jax.experimental.pallas import tpu as pltpu


_LANE = 128      # lane width (last-dim alignment)
_SUB_I8 = 32     # sublane alignment for int8 tiles (8 sublanes x 4-packing)


def _round_up(v, m):
    return ((v + m - 1) // m) * m


def _gcn_kernel(adj_ref, x_ref, xown_ref, w_ref, b_ref, o_ref, acc_ref, deg_ref):
    """One (node-tile i, neighbour-tile k) grid step.

    adj_ref : [tile_n, tile_k] int8  adjacency tile (adj[v,u]=1 iff edge u->v)
    x_ref   : [tile_k, fi_pad] f32   neighbour features for this k tile
    xown_ref: [tile_n, fi_pad] f32   this node tile's own features (fallback)
    w_ref   : [fi_pad, fo_pad] f32   pre-transposed Linear weight (MXU-native)
    b_ref   : [1, fo_pad]      f32   bias
    o_ref   : [tile_n, fo_pad]       output tile (written on the last k step)
    acc_ref : [tile_n, fi_pad] f32   VMEM accumulator for sum_u adj[v,u]*x[u]
    deg_ref : [tile_n, 1]      f32   VMEM accumulator for the in-degree
    """
    k = pl.program_id(1)

    @pl.when(k == 0)
    def _init():
        acc_ref[...] = jnp.zeros_like(acc_ref)
        deg_ref[...] = jnp.zeros_like(deg_ref)

    # int8 {0,1} -> f32 is exact; cast happens in VMEM, HBM only sees int8.
    adj = adj_ref[...].astype(jnp.float32)
    acc_ref[...] += jnp.dot(adj, x_ref[...], preferred_element_type=jnp.float32)
    # In-degree accumulated alongside the matmul (row reduce = XLU slot).
    deg_ref[...] += jnp.sum(adj, axis=1, keepdims=True)

    @pl.when(k == pl.num_programs(1) - 1)
    def _finalize():
        deg = deg_ref[...]
        # Mean: cheap [tile_n, 1] reciprocal + broadcast multiply (no full
        # [tile_n, fi_pad] divide).
        inv_deg = 1.0 / jnp.maximum(deg, 1.0)
        # DGL semantics: nodes with no incoming messages keep their feature.
        agg = jnp.where(deg > 0.0, acc_ref[...] * inv_deg, xown_ref[...])
        h = jnp.dot(agg, w_ref[...], preferred_element_type=jnp.float32)
        h = h + b_ref[...]
        o_ref[...] = jnp.maximum(h, 0.0).astype(o_ref.dtype)   # ReLU


@functools.partial(jax.jit, static_argnames=("tile_n", "tile_k"))
def gcn_forward(adj, x, W, b, *, tile_n=256, tile_k=512):
    """adj: [N, N] dense adjacency (adj[v, u] = 1 iff edge u -> v, values {0,1}),
    x: [N, in_feats] node features,
    W: [out_feats, in_feats] (PyTorch Linear layout), b: [out_feats]."""
    N, in_feats = x.shape
    out_feats = W.shape[0]
    out_dtype = x.dtype

    # Tile sizing: node-row tile aligned to the int8 sublane tile (32); the
    # neighbour / contraction tile aligned to the 128-lane width.
    tile_n = int(min(tile_n, _round_up(N, _SUB_I8)))
    tile_k = int(min(tile_k, _round_up(N, _LANE)))
    tile_n = _round_up(tile_n, _SUB_I8)
    tile_k = _round_up(tile_k, _LANE)
    n_pad = _round_up(N, math.lcm(tile_n, tile_k))
    fi_pad = _round_up(in_feats, _LANE)
    fo_pad = _round_up(out_feats, _LANE)

    # int8 adjacency in HBM (4x less DMA than f32); one fused cast+pad pass.
    adj_p = jnp.zeros((n_pad, n_pad), jnp.int8).at[:N, :N].set(adj.astype(jnp.int8))
    x_p = jnp.zeros((n_pad, fi_pad), jnp.float32).at[:N, :in_feats].set(
        x.astype(jnp.float32))
    # Pre-transpose W -> [in, out]: second matmul is MXU-native; the transpose
    # rides the padded copy we already materialize (no extra HBM pass).
    w_p = jnp.zeros((fi_pad, fo_pad), jnp.float32).at[:in_feats, :out_feats].set(
        W.astype(jnp.float32).T)
    b_p = jnp.zeros((1, fo_pad), jnp.float32).at[0, :out_feats].set(
        b.astype(jnp.float32))

    grid = (n_pad // tile_n, n_pad // tile_k)   # reduction (k) axis innermost

    # VMEM footprint estimate (double-buffered inputs/outputs + scratch).
    est = (2 * tile_n * tile_k * 1          # adj tile (int8)
           + 2 * tile_k * fi_pad * 4        # neighbour-feature tile
           + 2 * tile_n * fi_pad * 4        # own-feature tile
           + 2 * fi_pad * fo_pad * 4        # W^T (resident)
           + 2 * _LANE * fo_pad * 4         # bias
           + 2 * tile_n * fo_pad * 4        # output tile
           + tile_n * fi_pad * 4            # accumulator
           + tile_n * _LANE * 4)            # degree accumulator
    vmem_limit = None
    if est > (12 << 20):
        # Raise the scoped limit, with headroom against v7x's 64 MiB VMEM.
        vmem_limit = int(min(2 * est, 48 << 20))

    out = pl.pallas_call(
        _gcn_kernel,
        out_shape=jax.ShapeDtypeStruct((n_pad, fo_pad), out_dtype),
        grid=grid,
        in_specs=[
            pl.BlockSpec((tile_n, tile_k), lambda i, k: (i, k)),   # adjacency tile
            pl.BlockSpec((tile_k, fi_pad), lambda i, k: (k, 0)),   # neighbour feats
            pl.BlockSpec((tile_n, fi_pad), lambda i, k: (i, 0)),   # own feats
            pl.BlockSpec((fi_pad, fo_pad), lambda i, k: (0, 0)),   # W^T (resident)
            pl.BlockSpec((1, fo_pad), lambda i, k: (0, 0)),        # bias (resident)
        ],
        out_specs=pl.BlockSpec((tile_n, fo_pad), lambda i, k: (i, 0)),
        scratch_shapes=[
            pltpu.VMEM((tile_n, fi_pad), jnp.float32),   # matmul accumulator
            pltpu.VMEM((tile_n, 1), jnp.float32),        # in-degree accumulator
        ],
        compiler_params=pltpu.CompilerParams(
            dimension_semantics=("parallel", "arbitrary"),
            vmem_limit_bytes=vmem_limit),
    )(adj_p, x_p, x_p, w_p, b_p)

    return out[:N, :out_feats]


def _reference(adj, x, W, b):
    deg = jnp.sum(adj, axis=1, keepdims=True)
    agg = jnp.where(deg > 0.0, (adj @ x) / jnp.maximum(deg, 1.0), x)
    return jnp.maximum(agg @ W.T + b, 0.0)


if __name__ == "__main__":
    # Small shapes consistent with the module's forward; large enough to
    # exercise both grid axes and the padded feature dims.
    N = 300
    in_feats = 48
    out_feats = 40

    key = jax.random.PRNGKey(0)
    k1, k2, k3, k4 = jax.random.split(key, 4)

    x = jax.random.normal(k1, (N, in_feats), jnp.float32)
    W = jax.random.normal(k2, (out_feats, in_feats), jnp.float32) * 0.1
    b = jax.random.normal(k3, (out_feats,), jnp.float32) * 0.1

    # Deterministic random directed graph; adj[v, u] = 1 iff edge u -> v.
    adj = (jax.random.uniform(k4, (N, N)) < 0.05).astype(jnp.float32)
    adj = adj * (1.0 - jnp.eye(N, dtype=jnp.float32))   # no self-loops
    adj = adj.at[3, :].set(0.0)    # isolated node: keeps its own feature
    adj = adj.at[77, :].set(0.0)   # another isolated node

    # tile_n=64, tile_k=128 -> n_pad=384, grid=(6, 3): exercises the parallel
    # node axis and the k-accumulation axis (init/finalize paths).
    out = gcn_forward(adj, x, W, b, tile_n=64, tile_k=128)
    out = jax.block_until_ready(out)

    ref = _reference(adj, x, W, b)
    assert out.shape == (N, out_feats)
    err = float(jnp.max(jnp.abs(out - ref)))
    # MXU default precision on f32 inputs may truncate to bf16; compare ~1e-3.
    assert jnp.allclose(out, ref, atol=2e-3, rtol=2e-3), (
        f"mismatch vs reference (max abs err {err})")

    print("KERNEL_OK")
</pallas_src>

<mosaic_0001>
module attributes {stable_mosaic.version = 11 : i64} {
  func.func @_gcn_kernel(%arg0: i32, %arg1: i32, %arg2: memref<64x128xi8, #tpu.memory_space<vmem>>, %arg3: memref<128x128xf32, #tpu.memory_space<vmem>>, %arg4: memref<64x128xf32, #tpu.memory_space<vmem>>, %arg5: memref<128x128xf32, #tpu.memory_space<vmem>>, %arg6: memref<1x128xf32, #tpu.memory_space<vmem>>, %arg7: memref<64x128xf32, #tpu.memory_space<vmem>>, %arg8: memref<64x128xf32, #tpu.memory_space<vmem>>, %arg9: memref<64x1xf32, #tpu.memory_space<vmem>>) attributes {dimension_semantics = [#tpu.dimension_semantics<parallel>, #tpu.dimension_semantics<arbitrary>], iteration_bounds = array<i64: 6, 3>, scalar_prefetch = 0 : i64, scratch_operands = 2 : i64, tpu.core_type = #tpu.core_type<tc>, window_params = [{transform_indices = @transform_0, window_bounds = array<i64: 64, 128>}, {transform_indices = @transform_1, window_bounds = array<i64: 128, 128>}, {transform_indices = @transform_2, window_bounds = array<i64: 64, 128>}, {pipeline_mode = #tpu.pipeline_mode<synchronous>, transform_indices = @transform_3, window_bounds = array<i64: 128, 128>}, {pipeline_mode = #tpu.pipeline_mode<synchronous>, transform_indices = @transform_4, window_bounds = array<i64: 1, 128>}, {transform_indices = @transform_5, window_bounds = array<i64: 64, 128>}]} {
    %c0_i32 = arith.constant 0 : i32
    %0 = arith.cmpi eq, %arg1, %c0_i32 : i32
    %1 = arith.extui %0 : i1 to i32
    %c0_i32_0 = arith.constant 0 : i32
    %2 = arith.cmpi ne, %1, %c0_i32_0 : i32
    scf.if %2 {
      %cst_14 = arith.constant 0.000000e+00 : f32
      %18 = vector.broadcast %cst_14 : f32 to vector<64x128xf32>
      %c0_15 = arith.constant 0 : index
      %c0_16 = arith.constant 0 : index
      %19 = vector.load %arg8[%c0_15, %c0_16] : memref<64x128xf32, #tpu.memory_space<vmem>>, vector<64x128xf32>
      tpu.vector_store %arg8[%c0_15, %c0_16], %18 {strides = array<i32>} : memref<64x128xf32, #tpu.memory_space<vmem>>, vector<64x128xf32>,
      %cst_17 = arith.constant 0.000000e+00 : f32
      %20 = vector.broadcast %cst_17 : f32 to vector<64x1xf32>
      %c0_18 = arith.constant 0 : index
      %c0_19 = arith.constant 0 : index
      %21 = vector.load %arg9[%c0_18, %c0_19] : memref<64x1xf32, #tpu.memory_space<vmem>>, vector<64x1xf32>
      tpu.vector_store %arg9[%c0_18, %c0_19], %20 {strides = array<i32>} : memref<64x1xf32, #tpu.memory_space<vmem>>, vector<64x1xf32>,
    } else {
    }
    %c0 = arith.constant 0 : index
    %c0_1 = arith.constant 0 : index
    %3 = vector.load %arg2[%c0, %c0_1] : memref<64x128xi8, #tpu.memory_space<vmem>>, vector<64x128xi8>
    %4 = arith.sitofp %3 : vector<64x128xi8> to vector<64x128xf32>
    %c0_2 = arith.constant 0 : index
    %c0_3 = arith.constant 0 : index
    %5 = vector.load %arg8[%c0_2, %c0_3] : memref<64x128xf32, #tpu.memory_space<vmem>>, vector<64x128xf32>
    %c0_4 = arith.constant 0 : index
    %c0_5 = arith.constant 0 : index
    %6 = vector.load %arg3[%c0_4, %c0_5] : memref<128x128xf32, #tpu.memory_space<vmem>>, vector<128x128xf32>
    %cst = arith.constant dense<0.000000e+00> : vector<64x128xf32>
    %7 = tpu.matmul %4, %6, %cst {dimension_numbers = #tpu.dot_dimension_numbers<[1], [0], [0], [1], [0, 0, 1, 1], [], []>} : vector<64x128xf32>, vector<128x128xf32>, vector<64x128xf32> -> vector<64x128xf32>
    %8 = arith.addf %5, %7 : vector<64x128xf32>
    %c0_6 = arith.constant 0 : index
    %c0_7 = arith.constant 0 : index
    %9 = vector.load %arg8[%c0_6, %c0_7] : memref<64x128xf32, #tpu.memory_space<vmem>>, vector<64x128xf32>
    tpu.vector_store %arg8[%c0_6, %c0_7], %8 {strides = array<i32>} : memref<64x128xf32, #tpu.memory_space<vmem>>, vector<64x128xf32>,
    %c0_8 = arith.constant 0 : index
    %c0_9 = arith.constant 0 : index
    %10 = vector.load %arg9[%c0_8, %c0_9] : memref<64x1xf32, #tpu.memory_space<vmem>>, vector<64x1xf32>
    %cst_10 = arith.constant dense<0.000000e+00> : vector<64xf32>
    %11 = vector.multi_reduction <add>, %4, %cst_10 [1] : vector<64x128xf32> to vector<64xf32>
    %12 = vector.shape_cast %11 : vector<64xf32> to vector<64x1xf32>
    %13 = arith.addf %10, %12 : vector<64x1xf32>
    %c0_11 = arith.constant 0 : index
    %c0_12 = arith.constant 0 : index
    %14 = vector.load %arg9[%c0_11, %c0_12] : memref<64x1xf32, #tpu.memory_space<vmem>>, vector<64x1xf32>
    tpu.vector_store %arg9[%c0_11, %c0_12], %13 {strides = array<i32>} : memref<64x1xf32, #tpu.memory_space<vmem>>, vector<64x1xf32>,
    %c2_i32 = arith.constant 2 : i32
    %15 = arith.cmpi eq, %arg1, %c2_i32 : i32
    %16 = arith.extui %15 : i1 to i32
    %c0_i32_13 = arith.constant 0 : i32
    %17 = arith.cmpi ne, %16, %c0_i32_13 : i32
    scf.if %17 {
      %c0_14 = arith.constant 0 : index
      %c0_15 = arith.constant 0 : index
      %18 = vector.load %arg9[%c0_14, %c0_15] : memref<64x1xf32, #tpu.memory_space<vmem>>, vector<64x1xf32>
      %cst_16 = arith.constant 1.000000e+00 : f32
      %19 = vector.broadcast %cst_16 : f32 to vector<64x1xf32>
      %20 = arith.maximumf %18, %19 : vector<64x1xf32>
      %cst_17 = arith.constant 1.000000e+00 : f32
      %21 = vector.broadcast %cst_17 : f32 to vector<64x1xf32>
      %22 = arith.divf %21, %20 : vector<64x1xf32>
      %cst_18 = arith.constant 0.000000e+00 : f32
      %23 = vector.broadcast %cst_18 : f32 to vector<64x1xf32>
      %24 = arith.cmpf ogt, %18, %23 : vector<64x1xf32>
      %c0_19 = arith.constant 0 : index
      %c0_20 = arith.constant 0 : index
      %25 = vector.load %arg8[%c0_19, %c0_20] : memref<64x128xf32, #tpu.memory_space<vmem>>, vector<64x128xf32>
      %26 = vector.broadcast %22 : vector<64x1xf32> to vector<64x128xf32>
      %27 = arith.mulf %25, %26 : vector<64x128xf32>
      %c0_21 = arith.constant 0 : index
      %c0_22 = arith.constant 0 : index
      %28 = vector.load %arg4[%c0_21, %c0_22] : memref<64x128xf32, #tpu.memory_space<vmem>>, vector<64x128xf32>
      %29 = vector.shape_cast %24 : vector<64x1xi1> to vector<64x1xi1>
      %30 = vector.broadcast %29 : vector<64x1xi1> to vector<64x128xi1>
      %31 = arith.select %30, %27, %28 : vector<64x128xi1>, vector<64x128xf32>
      %c0_23 = arith.constant 0 : index
      %c0_24 = arith.constant 0 : index
      %32 = vector.load %arg5[%c0_23, %c0_24] : memref<128x128xf32, #tpu.memory_space<vmem>>, vector<128x128xf32>
      %cst_25 = arith.constant dense<0.000000e+00> : vector<64x128xf32>
      %33 = tpu.matmul %31, %32, %cst_25 {dimension_numbers = #tpu.dot_dimension_numbers<[1], [0], [0], [1], [0, 0, 1, 1], [], []>} : vector<64x128xf32>, vector<128x128xf32>, vector<64x128xf32> -> vector<64x128xf32>
      %c0_26 = arith.constant 0 : index
      %c0_27 = arith.constant 0 : index
      %34 = vector.load %arg6[%c0_26, %c0_27] : memref<1x128xf32, #tpu.memory_space<vmem>>, vector<1x128xf32>
      %35 = vector.broadcast %34 : vector<1x128xf32> to vector<64x128xf32>
      %36 = arith.addf %33, %35 : vector<64x128xf32>
      %cst_28 = arith.constant 0.000000e+00 : f32
      %37 = vector.broadcast %cst_28 : f32 to vector<64x128xf32>
      %38 = arith.maximumf %36, %37 : vector<64x128xf32>
      %c0_29 = arith.constant 0 : index
      %c0_30 = arith.constant 0 : index
      %39 = vector.load %arg7[%c0_29, %c0_30] : memref<64x128xf32, #tpu.memory_space<vmem>>, vector<64x128xf32>
      tpu.vector_store %arg7[%c0_29, %c0_30], %38 {strides = array<i32>} : memref<64x128xf32, #tpu.memory_space<vmem>>, vector<64x128xf32>,
    } else {
    }
    return
  }
  func.func @transform_0(%arg0: i32, %arg1: i32) -> (i32, i32) {
    %c0_i32 = arith.constant 0 : i32
    return %arg0, %arg1 : i32, i32
  }
  func.func @transform_1(%arg0: i32, %arg1: i32) -> (i32, i32) {
    %c0_i32 = arith.constant 0 : i32
    %c0_i32_0 = arith.constant 0 : i32
    return %arg1, %c0_i32 : i32, i32
  }
  func.func @transform_2(%arg0: i32, %arg1: i32) -> (i32, i32) {
    %c0_i32 = arith.constant 0 : i32
    %c0_i32_0 = arith.constant 0 : i32
    return %arg0, %c0_i32 : i32, i32
  }
  func.func @transform_3(%arg0: i32, %arg1: i32) -> (i32, i32) {
    %c0_i32 = arith.constant 0 : i32
    %c0_i32_0 = arith.constant 0 : i32
    %c0_i32_1 = arith.constant 0 : i32
    return %c0_i32, %c0_i32_0 : i32, i32
  }
  func.func @transform_4(%arg0: i32, %arg1: i32) -> (i32, i32) {
    %c0_i32 = arith.constant 0 : i32
    %c0_i32_0 = arith.constant 0 : i32
    %c0_i32_1 = arith.constant 0 : i32
    return %c0_i32, %c0_i32_0 : i32, i32
  }
  func.func @transform_5(%arg0: i32, %arg1: i32) -> (i32, i32) {
    %c0_i32 = arith.constant 0 : i32
    %c0_i32_0 = arith.constant 0 : i32
    return %arg0, %c0_i32 : i32, i32
  }
}

</mosaic_0001>

<llo_original>
// kernel: gcn_forward.1
$region0: #{gcn_forward.1}
  #allocation0 [shape = 'u32[]', space=smem, size = 0x4, offset = 0x4, fixed_abs, tag = 'smem constant byte address 0x4 - core index']
  #allocation1 [shape = 'u32[72,128]{1,0:T(1,128)}', space=vmem, size = 0x9000, scoped, tag = 'internal scratch']
  #allocation2 [shape = 'f32[64,128]{1,0:T(8,128)}', space=vmem, size = 0x8000, scoped, tag = 'scratch operand']
  #allocation3 [shape = 'f32[64,1]{1,0:T(8,128)}', space=vmem, size = 0x8000, scoped, tag = 'scratch operand']
  %s0 = inlined_call_operand.vmem [shape: s8[384,384], index: 0, kind: input, shape index: {}]
  %s1 = inlined_call_operand.vmem [shape: f32[384,128], index: 1, kind: input, shape index: {}, may-alias: {1,2}]
  %s2 = inlined_call_operand.vmem [shape: f32[384,128], index: 2, kind: input, shape index: {}, may-alias: {1,2}]
  %s3 = inlined_call_operand.vmem [shape: f32[128,128], index: 3, kind: input, shape index: {}]
  %s4 = inlined_call_operand.vmem [shape: f32[1,128], index: 4, kind: input, shape index: {}]
  %s5 = inlined_call_operand.vmem [shape: f32[384,128], index: 5, kind: output, shape index: {}]
  %s6 = sld [smem:[#allocation0]]
  $region99: #{gcn_forward.1} parent=0
    _
  %s8 = ssub.s32 1, %s6
  %s9 = scalar_select 0, %s8, %s6
  $region1: #{gcn_forward.1} parent=0
    #allocation4 [shape = 'u8[16384]{0}', space=vmem, size = 0x4000, scoped, tag = 'input window, operand 0']
    loop: start=0, step=1, limit=20
    $region2: #{gcn_forward.1} parent=1 // loop_pre_header
      _
    $region3: #{gcn_forward.1} parent=1 // loop_header
      %s11 = sphi 0, %s15
      %p12 = scmp.ge.s32.totalorder %s11, 20
      %s18 = sphi 0, %s30
      %s19 = sphi 0, %s26
      %s20 = sphi 0, %s18
      %s21 = sphi 0, %s19
      %s22 = sphi 0, %s20
      %s23 = sphi 0, %s21
      %s35 = sphi 0, %s37
      %s38 = sphi 0, %s35
      %s39 = sphi 0, %s38
      %s55 = sphi 0, %s39
      %s61 = sphi 0, %s63
      %s64 = sphi 0, %s61
      %s65 = sphi 0, %s64
      %s81 = sphi 0, %s65
      %s87 = sphi 0, %s89
      %s90 = sphi 0, %s87
      %s91 = sphi 0, %s90
      %s107 = sphi 0, %s91
      %s111 = sphi 0, %s111
      %s113 = sphi 0, %s111
      %s114 = sphi 0, %s113
      %s128 = sphi 0, %s114
      %s132 = sphi 0, %s132
      %s134 = sphi 0, %s132
      %s135 = sphi 0, %s134
      %s149 = sphi 0, %s135
      %s155 = sphi 0, %s157
      %s158 = sphi 0, %s155
      %s159 = sphi 0, %s158
      %s175 = sphi 0, %s159
    $region4: #{gcn_forward.1} parent=1 // loop_header_branch
      %14 = sbr.rel (%p12) target = $region8
    $region5: #{gcn_forward.1} parent=1 // loop_body
      %s16 = ssub.s32 %s11, 1
      %s17 = ssub.s32 %s11, 2
      %s24 = sadd.s32 1, %s19
      %p25 = scmp.ge.s32.totalorder %s24, 3
      %s26 = scalar_select %p25, 0, %s24
      %s27 = sadd.s32 1, %s18
      %s28 = scalar_select %p25, %s27, %s18
      %p29 = scmp.ge.s32.totalorder %s28, 6
      %s30 = scalar_select %p29, 0, %s28
      %s31 = ssub.s32 %s18, %s30
      %s32 = ssub.s32 %s19, %s26
      %s33 = sor.u32 %s31, %s32
      %p34 = scmp.eq.s32.totalorder %s33, 0
      %s36 = sadd.s32 %s35, 1
      %s37 = scalar_select %p34, %s35, %s36
      %p40 = pneg %p34
      %p41 = scmp.eq.s32.totalorder %s11, 17
      %p42 = por %p40, %p41
      %p43 = scmp.ne.s32.totalorder %s35, %s38
      %p44 = scmp.eq.s32.totalorder %s11, 0
      %p45 = por %p43, %p44
      %p46 = scmp.ne.s32.totalorder %s35, %s38
      %p47 = scmp.eq.s32.totalorder %s16, 17
      %p48 = por %p46, %p47
      %p49 = scmp.ne.s32.totalorder %s38, %s39
      %p50 = scmp.eq.s32.totalorder %s16, 0
      %p51 = por %p49, %p50
      %p52 = scmp.ne.s32.totalorder %s38, %s39
      %p53 = scmp.eq.s32.totalorder %s17, 17
      %p54 = por %p52, %p53
      %p56 = scmp.ne.s32.totalorder %s39, %s55
      %p57 = scmp.eq.s32.totalorder %s17, 0
      %p58 = por %p56, %p57
      %s59 = ssub.s32 %s19, %s26
      %p60 = scmp.eq.s32.totalorder %s59, 0
      %s62 = sadd.s32 %s61, 1
      %s63 = scalar_select %p60, %s61, %s62
      %p66 = pneg %p60
      %p67 = scmp.eq.s32.totalorder %s11, 17
      %p68 = por %p66, %p67
      %p69 = scmp.ne.s32.totalorder %s61, %s64
      %p70 = scmp.eq.s32.totalorder %s11, 0
      %p71 = por %p69, %p70
      %p72 = scmp.ne.s32.totalorder %s61, %s64
      %p73 = scmp.eq.s32.totalorder %s16, 17
      %p74 = por %p72, %p73
      %p75 = scmp.ne.s32.totalorder %s64, %s65
      %p76 = scmp.eq.s32.totalorder %s16, 0
      %p77 = por %p75, %p76
      %p78 = scmp.ne.s32.totalorder %s64, %s65
      %p79 = scmp.eq.s32.totalorder %s17, 17
      %p80 = por %p78, %p79
      %p82 = scmp.ne.s32.totalorder %s65, %s81
      %p83 = scmp.eq.s32.totalorder %s17, 0
      %p84 = por %p82, %p83
      %s85 = ssub.s32 %s18, %s30
      %p86 = scmp.eq.s32.totalorder %s85, 0
      %s88 = sadd.s32 %s87, 1
      %s89 = scalar_select %p86, %s87, %s88
      %p92 = pneg %p86
      %p93 = scmp.eq.s32.totalorder %s11, 17
      %p94 = por %p92, %p93
      %p95 = scmp.ne.s32.totalorder %s87, %s90
      %p96 = scmp.eq.s32.totalorder %s11, 0
      %p97 = por %p95, %p96
      %p98 = scmp.ne.s32.totalorder %s87, %s90
      %p99 = scmp.eq.s32.totalorder %s16, 17
      %p100 = por %p98, %p99
      %p101 = scmp.ne.s32.totalorder %s90, %s91
      %p102 = scmp.eq.s32.totalorder %s16, 0
      %p103 = por %p101, %p102
      %p104 = scmp.ne.s32.totalorder %s90, %s91
      %p105 = scmp.eq.s32.totalorder %s17, 17
      %p106 = por %p104, %p105
      %p108 = scmp.ne.s32.totalorder %s91, %s107
      %p109 = scmp.eq.s32.totalorder %s17, 0
      %p110 = por %p108, %p109
      %s112 = sadd.s32 %s111, 1
      %p115 = scmp.eq.s32.totalorder %s11, 17
      %p116 = scmp.ne.s32.totalorder %s111, %s113
      %p117 = scmp.eq.s32.totalorder %s11, 0
      %p118 = por %p116, %p117
      %p119 = scmp.ne.s32.totalorder %s111, %s113
      %p120 = scmp.eq.s32.totalorder %s16, 17
      %p121 = por %p119, %p120
      %p122 = scmp.ne.s32.totalorder %s113, %s114
      %p123 = scmp.eq.s32.totalorder %s16, 0
      %p124 = por %p122, %p123
      %p125 = scmp.ne.s32.totalorder %s113, %s114
      %p126 = scmp.eq.s32.totalorder %s17, 17
      %p127 = por %p125, %p126
      %p129 = scmp.ne.s32.totalorder %s114, %s128
      %p130 = scmp.eq.s32.totalorder %s17, 0
      %p131 = por %p129, %p130
      %s133 = sadd.s32 %s132, 1
      %p136 = scmp.eq.s32.totalorder %s11, 17
      %p137 = scmp.ne.s32.totalorder %s132, %s134
      %p138 = scmp.eq.s32.totalorder %s11, 0
      %p139 = por %p137, %p138
      %p140 = scmp.ne.s32.totalorder %s132, %s134
      %p141 = scmp.eq.s32.totalorder %s16, 17
      %p142 = por %p140, %p141
      %p143 = scmp.ne.s32.totalorder %s134, %s135
      %p144 = scmp.eq.s32.totalorder %s16, 0
      %p145 = por %p143, %p144
      %p146 = scmp.ne.s32.totalorder %s134, %s135
      %p147 = scmp.eq.s32.totalorder %s17, 17
      %p148 = por %p146, %p147
      %p150 = scmp.ne.s32.totalorder %s135, %s149
      %p151 = scmp.eq.s32.totalorder %s17, 0
      %p152 = por %p150, %p151
      %s153 = ssub.s32 %s18, %s30
      %p154 = scmp.eq.s32.totalorder %s153, 0
      %s156 = sadd.s32 %s155, 1
      %s157 = scalar_select %p154, %s155, %s156
      %p160 = pneg %p154
      %p161 = scmp.eq.s32.totalorder %s11, 17
      %p162 = por %p160, %p161
      %p163 = scmp.ne.s32.totalorder %s155, %s158
      %p164 = scmp.eq.s32.totalorder %s11, 0
      %p165 = por %p163, %p164
      %p166 = scmp.ne.s32.totalorder %s155, %s158
      %p167 = scmp.eq.s32.totalorder %s16, 17
      %p168 = por %p166, %p167
      %p169 = scmp.ne.s32.totalorder %s158, %s159
      %p170 = scmp.eq.s32.totalorder %s16, 0
      %p171 = por %p169, %p170
      %p172 = scmp.ne.s32.totalorder %s158, %s159
      %p173 = scmp.eq.s32.totalorder %s17, 17
      %p174 = por %p172, %p173
      %p176 = scmp.ne.s32.totalorder %s159, %s175
      %p177 = scmp.eq.s32.totalorder %s17, 0
      %p178 = por %p176, %p177
      %p179 = scmp.le.s32.totalorder 1, %s11
      %p180 = scmp.lt.s32.totalorder %s11, 19
      %p181 = pnand %p179, %p180
      %p182 = pneg %p181
      // Predicated region
      $region9: #{gcn_forward.1} parent=5 // pred_check
        _
      $region10: #{gcn_forward.1} parent=5 // pred_check_branch
        %184 = sbr.rel (%p181) target = $region12
      $region11: #{gcn_forward.1} parent=5 // pred_region
        %s185 = ssub.s32 %s11, 1
        // Predicated region
        $region13: #{gcn_forward.1} parent=11 // pred_check
          %p186 = pneg %p124
        $region14: #{gcn_forward.1} parent=11 // pred_check_branch
          %188 = sbr.rel (%p186) target = $region16
        $region15: #{gcn_forward.1} parent=11 // pred_region
          _
        $region16: #{gcn_forward.1} parent=11 // pred_fallthru
          _
        // Predicated region
        $region17: #{gcn_forward.1} parent=11 // pred_check
          %p189 = pneg %p145
        $region18: #{gcn_forward.1} parent=11 // pred_check_branch
          %191 = sbr.rel (%p189) target = $region20
        $region19: #{gcn_forward.1} parent=11 // pred_region
          _
        $region20: #{gcn_forward.1} parent=11 // pred_fallthru
          _
      $region12: #{gcn_forward.1} parent=5 // pred_fallthru
        _
      %p192 = scmp.lt.s32.totalorder %s11, 18
      // Predicated region
      $region21: #{gcn_forward.1} parent=5 // pred_check
        %p193 = pneg %p192
      $region22: #{gcn_forward.1} parent=5 // pred_check_branch
        %195 = sbr.rel (%p193) target = $region24
      $region23: #{gcn_forward.1} parent=5 // pred_region
        // Predicated region
        $region25: #{gcn_forward.1} parent=23 // pred_check
          %p196 = pneg %p45
        $region26: #{gcn_forward.1} parent=23 // pred_check_branch
          %198 = sbr.rel (%p196) target = $region28
        $region27: #{gcn_forward.1} parent=23 // pred_region
          %s199 = sand.u32 %s35, 1
          %s200 = sand.u32 %s35, 1
          %s201 = smul.addr %s200, 16
          %s202 = scalar_lea.vmem [#allocation4], %s201
          %s203 = smul.u32 2, %s18
          %s204 = smul.addr %s203, 3
          %s205 = sadd.s32 %s19, %s204
          %s206 = smul.addr %s205, 8
          %s207 = scalar_lea.vmem %s0, %s206
          // Predicated region
          $region29: #{gcn_forward.1} parent=27 // pred_check
            _
          $region30: #{gcn_forward.1} parent=27 // pred_check_branch
            %209 = sbr.rel (0) target = $region32
          $region31: #{gcn_forward.1} parent=27 // pred_region
            // Predicated region
            $region33: #{gcn_forward.1} parent=31 // pred_check
              _
            $region34: #{gcn_forward.1} parent=31 // pred_check_branch
              %211 = sbr.rel (0) target = $region36
            $region35: #{gcn_forward.1} parent=31 // pred_region
              // Predicated region
              $region48: #{gcn_forward.1} parent=35 // pred_check
                _
              $region49: #{gcn_forward.1} parent=35 // pred_check_branch
                %229 = sbr.rel (0) target = $region51
              $region50: #{gcn_forward.1} parent=35 // pred_region
                loop: start=0, step=1, limit=1
                $region52: #{gcn_forward.1} parent=50 // loop_pre_header
                  _
                $region53: #{gcn_forward.1} parent=50 // loop_header
                  %s231 = sphi 0, %s235
                  %p232 = scmp.ge.s32.totalorder %s231, 1
                  %s236 = sphi %s207, %s207
                  %s237 = sphi %s202, %s202
                $region54: #{gcn_forward.1} parent=50 // loop_header_branch
                  %234 = sbr.rel (%p232) target = $region58
                $region55: #{gcn_forward.1} parent=50 // loop_body
                  %v238 = vld [vmem:[%s236] sm:$0xff]
                  %239 = vst [vmem:[%s237] sm:$0xff] %v238
                  %v240 = vld [vmem:[%s236 + $0x18] sm:$0xff]
                  %241 = vst [vmem:[%s237 + $0x8] sm:$0xff] %v240
                $region56: #{gcn_forward.1} parent=50 // loop_footer
                  %s235 = sadd.s32 1, %s231
                $region57: #{gcn_forward.1} parent=50 // loop_footer_branch
                  %230 = sbr.rel target = $region53
                $region58: #{gcn_forward.1} parent=50 // loop_exit
                  _
              $region51: #{gcn_forward.1} parent=35 // pred_fallthru
                _
              // Predicated region
              $region59: #{gcn_forward.1} parent=35 // pred_check
                _
              $region60: #{gcn_forward.1} parent=35 // pred_check_branch
                %243 = sbr.rel target = $region62
              $region61: #{gcn_forward.1} parent=35 // pred_region
                _
              $region62: #{gcn_forward.1} parent=35 // pred_fallthru
                _
            $region36: #{gcn_forward.1} parent=31 // pred_fallthru
              _
            // Predicated region
            $region37: #{gcn_forward.1} parent=31 // pred_check
              _
            $region38: #{gcn_forward.1} parent=31 // pred_check_branch
              %213 = sbr.rel target = $region40
            $region39: #{gcn_forward.1} parent=31 // pred_region
              %s215 = ssub.s32 256, 1
              loop: start=0, step=1, limit=1
              $region41: #{gcn_forward.1} parent=39 // loop_pre_header
                _
              $region42: #{gcn_forward.1} parent=39 // loop_header
                %s217 = sphi 0, %s221
                %p218 = scmp.ge.s32.totalorder %s217, 1
                %s222 = sphi %s207, %s207
                %s223 = sphi %s202, %s202
              $region43: #{gcn_forward.1} parent=39 // loop_header_branch
                %220 = sbr.rel (%p218) target = $region47
              $region44: #{gcn_forward.1} parent=39 // loop_body
                %v224 = vld [vmem:[%s222] sm:%s215]
                %225 = vst [vmem:[%s223] sm:%s215] %v224
                %v226 = vld [vmem:[%s222 + $0x18] sm:%s215]
                %227 = vst [vmem:[%s223 + $0x8] sm:%s215] %v226
              $region45: #{gcn_forward.1} parent=39 // loop_footer
                %s221 = sadd.s32 1, %s217
              $region46: #{gcn_forward.1} parent=39 // loop_footer_branch
                %216 = sbr.rel target = $region42
              $region47: #{gcn_forward.1} parent=39 // loop_exit
                _
            $region40: #{gcn_forward.1} parent=31 // pred_fallthru
              _
          $region32: #{gcn_forward.1} parent=27 // pred_fallthru
            _
          %244 = vnop
        $region28: #{gcn_forward.1} parent=23 // pred_fallthru
          _
        // Predicated region
        $region63: #{gcn_forward.1} parent=23 // pred_check
          %p245 = pneg %p71
        $region64: #{gcn_forward.1} parent=23 // pred_check_branch
          %247 = sbr.rel (%p245) target = $region66
        $region65: #{gcn_forward.1} parent=23 // pred_region
          %s248 = smul.u32 16, %s19
          %p249 = scmp.lt.s32.totalorder %s248, 47
          %s250 = scalar_select %p249, %s248, 47
          %s251 = smul.addr %s250, 8
          %s252 = scalar_lea.vmem %s1, %s251
          %s253 = smul.u32 16, %s19
        $region66: #{gcn_forward.1} parent=23 // pred_fallthru
          _
        // Predicated region
        $region67: #{gcn_forward.1} parent=23 // pred_check
          %p254 = pneg %p97
        $region68: #{gcn_forward.1} parent=23 // pred_check_branch
          %256 = sbr.rel (%p254) target = $region70
        $region69: #{gcn_forward.1} parent=23 // pred_region
          %s257 = smul.u32 8, %s18
          %p258 = scmp.lt.s32.totalorder %s257, 47
          %s259 = scalar_select %p258, %s257, 47
          %s260 = smul.addr %s259, 8
          %s261 = scalar_lea.vmem %s2, %s260
          %s262 = smul.u32 8, %s18
        $region70: #{gcn_forward.1} parent=23 // pred_fallthru
          _
      $region24: #{gcn_forward.1} parent=5 // pred_fallthru
        _
      %p263 = scmp.le.s32.totalorder 1, %s11
      %p264 = scmp.lt.s32.totalorder %s11, 19
      %p265 = pnand %p263, %p264
      %p266 = pneg %p265
      // Predicated region
      $region71: #{gcn_forward.1} parent=5 // pred_check
        _
      $region72: #{gcn_forward.1} parent=5 // pred_check_branch
        %268 = sbr.rel (%p265) target = $region74
      $region73: #{gcn_forward.1} parent=5 // pred_region
        %s269 = ssub.s32 %s11, 1
        %s270 = sand.u32 %s38, 1
        %s271 = sand.u32 %s38, 1
        %s272 = smul.addr %s271, 16
        %s273 = scalar_lea.vmem [#allocation4], %s272
        // Predicated region
        $region75: #{gcn_forward.1} parent=73 // pred_check
          %p274 = pneg %p51
        $region76: #{gcn_forward.1} parent=73 // pred_check_branch
          %276 = sbr.rel (%p274) target = $region78
        $region77: #{gcn_forward.1} parent=73 // pred_region
          _
        $region78: #{gcn_forward.1} parent=73 // pred_fallthru
          _
        %s277 = sand.u32 %s38, 1
        %s278 = sand.u32 %s38, 1
        %s279 = smul.addr %s278, 16
        %s280 = scalar_lea.vmem [#allocation4], %s279
        %p281 = pneg %p51
        %p282 = pneg %p48
        %s283 = smul.u32 16, %s21
        %p284 = scmp.lt.s32.totalorder %s283, 47
        %s285 = scalar_select %p284, %s283, 47
        %s286 = smul.addr %s285, 8
        %s287 = scalar_lea.vmem %s1, %s286
        %p288 = pneg %p77
        %p289 = pneg %p74
        %s290 = smul.u32 8, %s20
        %p291 = scmp.lt.s32.totalorder %s290, 47
        %s292 = scalar_select %p291, %s290, 47
        %s293 = smul.addr %s292, 8
        %s294 = scalar_lea.vmem %s2, %s293
        %p295 = pneg %p103
        %p296 = pneg %p100
        %p297 = pneg %p124
        %p298 = pneg %p121
        %p299 = pneg %p145
        %p300 = pneg %p142
        %p301 = pneg %p171
        %p302 = pneg %p168
        %s303 = smul.u32 8, %s20
        %p304 = scmp.lt.s32.totalorder %s303, 47
        %s305 = scalar_select %p304, %s303, 47
        %s306 = smul.addr %s305, 8
        %s307 = scalar_lea.vmem %s5, %s306
        %s308 = smul.u32 2, %s20
        %s309 = smul.u32 16, %s21
        %p310 = scmp.lt.s32.totalorder %s309, 47
        %s311 = scalar_select %p310, %s309, 47
        %s312 = smul.addr %s311, 8
        %s313 = scalar_lea.vmem %s1, %s312
        %s314 = smul.u32 16, %s21
        %s315 = smul.u32 8, %s20
        %p316 = scmp.lt.s32.totalorder %s315, 47
        %s317 = scalar_select %p316, %s315, 47
        %s318 = smul.addr %s317, 8
        %s319 = scalar_lea.vmem %s2, %s318
        %s320 = smul.u32 8, %s20
        %s321 = smul.u32 8, %s20
        %p322 = scmp.lt.s32.totalorder %s321, 47
        %s323 = scalar_select %p322, %s321, 47
        %s324 = smul.addr %s323, 8
        %s325 = scalar_lea.vmem %s5, %s324
        %s326 = smul.u32 8, %s20
        %p327 = scmp.eq.s32.totalorder %s21, 0
        // Predicated region
        $region79: #{gcn_forward.1} parent=73 // pred_check
          %p328 = pneg %p327
        $region80: #{gcn_forward.1} parent=73 // pred_check_branch
          %330 = sbr.rel (%p328) target = $region82
        $region81: #{gcn_forward.1} parent=73 // pred_region
          %331 = vst [vmem:[#allocation2] sm:$0xff] 0.0
          %332 = vst [vmem:[#allocation2 + $0x8] sm:$0xff] 0.0
          %333 = vst [vmem:[#allocation2 + $0x10] sm:$0xff] 0.0
          %334 = vst [vmem:[#allocation2 + $0x18] sm:$0xff] 0.0
          %335 = vst [vmem:[#allocation2 + $0x20] sm:$0xff] 0.0
          %336 = vst [vmem:[#allocation2 + $0x28] sm:$0xff] 0.0
          %337 = vst [vmem:[#allocation2 + $0x30] sm:$0xff] 0.0
          %338 = vst [vmem:[#allocation2 + $0x38] sm:$0xff] 0.0
          %vm339 = vcmask 7168
          %340 = vst.msk [vmem:[#allocation3] sm:$0xff] %vm339, 0.0
          %341 = vst.msk [vmem:[#allocation3 + $0x8] sm:$0xff] %vm339, 0.0
          %342 = vst.msk [vmem:[#allocation3 + $0x10] sm:$0xff] %vm339, 0.0
          %343 = vst.msk [vmem:[#allocation3 + $0x18] sm:$0xff] %vm339, 0.0
          %344 = vst.msk [vmem:[#allocation3 + $0x20] sm:$0xff] %vm339, 0.0
          %345 = vst.msk [vmem:[#allocation3 + $0x28] sm:$0xff] %vm339, 0.0
          %346 = vst.msk [vmem:[#allocation3 + $0x30] sm:$0xff] %vm339, 0.0
          %347 = vst.msk [vmem:[#allocation3 + $0x38] sm:$0xff] %vm339, 0.0
        $region82: #{gcn_forward.1} parent=73 // pred_fallthru
          _
        %v348 = vld [vmem:[%s273] sm:$0xff]
        %v349 = vld [vmem:[%s273 + $0x8] sm:$0xff]
        %v350 = vunpack.c.0.s8 %v348
        %v351 = vunpack.c.1.s8 %v348
        %v352 = vunpack.c.2.s8 %v348
        %v353 = vunpack.c.3.s8 %v348
        %v354 = vunpack.c.0.s8 %v349
        %v355 = vunpack.c.1.s8 %v349
        %v356 = vunpack.c.2.s8 %v349
        %v357 = vunpack.c.3.s8 %v349
        %v358 = vcvt.s32.f32 %v350
        %v359 = vcvt.s32.f32 %v351
        %v360 = vcvt.s32.f32 %v352
        %v361 = vcvt.s32.f32 %v353
        %v362 = vcvt.s32.f32 %v354
        %v363 = vcvt.s32.f32 %v355
        %v364 = vcvt.s32.f32 %v356
        %v365 = vcvt.s32.f32 %v357
        %v366 = vld [vmem:[#allocation2] sm:$0xff]
        %v367 = vld [vmem:[#allocation2 + $0x8] sm:$0xff]
        %v368 = vld [vmem:[#allocation2 + $0x10] sm:$0xff]
        %v369 = vld [vmem:[#allocation2 + $0x18] sm:$0xff]
        %v370 = vld [vmem:[#allocation2 + $0x20] sm:$0xff]
        %v371 = vld [vmem:[#allocation2 + $0x28] sm:$0xff]
        %v372 = vld [vmem:[#allocation2 + $0x30] sm:$0xff]
        %v373 = vld [vmem:[#allocation2 + $0x38] sm:$0xff]
        %v374 = vld [vmem:[%s313] sm:$0xff]
        %v375 = vld [vmem:[%s313 + $0x8] sm:$0xff]
        %v376 = vld [vmem:[%s313 + $0x10] sm:$0xff]
        %v377 = vld [vmem:[%s313 + $0x18] sm:$0xff]
        %v378 = vld [vmem:[%s313 + $0x20] sm:$0xff]
        %v379 = vld [vmem:[%s313 + $0x28] sm:$0xff]
        %v380 = vld [vmem:[%s313 + $0x30] sm:$0xff]
        %v381 = vld [vmem:[%s313 + $0x38] sm:$0xff]
        %v382 = vld [vmem:[%s313 + $0x40] sm:$0xff]
        %v383 = vld [vmem:[%s313 + $0x48] sm:$0xff]
        %v384 = vld [vmem:[%s313 + $0x50] sm:$0xff]
        %v385 = vld [vmem:[%s313 + $0x58] sm:$0xff]
        %v386 = vld [vmem:[%s313 + $0x60] sm:$0xff]
        %v387 = vld [vmem:[%s313 + $0x68] sm:$0xff]
        %v388 = vld [vmem:[%s313 + $0x70] sm:$0xff]
        %v389 = vld [vmem:[%s313 + $0x78] sm:$0xff]
        %390 = vmatpush.msra.mxu0 %v389
        %391 = vmatpush.msra.mxu0 %v388
        %392 = vmatpush.msra.mxu0 %v387
        %393 = vmatpush.msra.mxu0 %v386
        %394 = vmatpush.msra.mxu0 %v385
        %395 = vmatpush.msra.mxu0 %v384
        %396 = vmatpush.msra.mxu0 %v383
        %397 = vmatpush.msra.mxu0 %v382
        %398 = vmatpush.msra.mxu0 %v381
        %399 = vmatpush.msra.mxu0 %v380
        %400 = vmatpush.msra.mxu0 %v379
        %401 = vmatpush.msra.mxu0 %v378
        %402 = vmatpush.msra.mxu0 %v377
        %403 = vmatpush.msra.mxu0 %v376
        %404 = vmatpush.msra.mxu0 %v375
        %405 = vmatpush.msra.mxu0 %v374
        %406 = vmatmul.f32.gmra.mxu0 %v358
        %v407 = vpop.f32.mrf.mxu0
        %v408 = vadd.f32 0.0, %v407
        %409 = vmatmul.f32.gmra.mxu0 %v359
        %v410 = vpop.f32.mrf.mxu0
        %v411 = vadd.f32 0.0, %v410
        %412 = vmatmul.f32.gmra.mxu0 %v360
        %v413 = vpop.f32.mrf.mxu0
        %v414 = vadd.f32 0.0, %v413
        %415 = vmatmul.f32.gmra.mxu0 %v361
        %v416 = vpop.f32.mrf.mxu0
        %v417 = vadd.f32 0.0, %v416
        %418 = vmatmul.f32.gmra.mxu0 %v362
        %v419 = vpop.f32.mrf.mxu0
        %v420 = vadd.f32 0.0, %v419
        %421 = vmatmul.f32.gmra.mxu0 %v363
        %v422 = vpop.f32.mrf.mxu0
        %v423 = vadd.f32 0.0, %v422
        %424 = vmatmul.f32.gmra.mxu0 %v364
        %v425 = vpop.f32.mrf.mxu0
        %v426 = vadd.f32 0.0, %v425
        %427 = vmatmul.f32.gmra.mxu0 %v365
        %v428 = vpop.f32.mrf.mxu0
        %v429 = vadd.f32 0.0, %v428
        %430 = vdwg.mxu0
        %v431 = vadd.f32 %v366, %v408
        %v432 = vadd.f32 %v367, %v411
        %v433 = vadd.f32 %v368, %v414
        %v434 = vadd.f32 %v369, %v417
        %v435 = vadd.f32 %v370, %v420
        %v436 = vadd.f32 %v371, %v423
        %v437 = vadd.f32 %v372, %v426
        %v438 = vadd.f32 %v373, %v429
        %439 = vst [vmem:[#allocation2] sm:$0xff] %v431
        %440 = vst [vmem:[#allocation2 + $0x8] sm:$0xff] %v432
        %441 = vst [vmem:[#allocation2 + $0x10] sm:$0xff] %v433
        %442 = vst [vmem:[#allocation2 + $0x18] sm:$0xff] %v434
        %443 = vst [vmem:[#allocation2 + $0x20] sm:$0xff] %v435
        %444 = vst [vmem:[#allocation2 + $0x28] sm:$0xff] %v436
        %445 = vst [vmem:[#allocation2 + $0x30] sm:$0xff] %v437
        %446 = vst [vmem:[#allocation2 + $0x38] sm:$0xff] %v438
        %v447 = vld [vmem:[#allocation3] sm:$0xff]
        %v448 = vld [vmem:[#allocation3 + $0x8] sm:$0xff]
        %v449 = vld [vmem:[#allocation3 + $0x10] sm:$0xff]
        %v450 = vld [vmem:[#allocation3 + $0x18] sm:$0xff]
        %v451 = vld [vmem:[#allocation3 + $0x20] sm:$0xff]
        %v452 = vld [vmem:[#allocation3 + $0x28] sm:$0xff]
        %v453 = vld [vmem:[#allocation3 + $0x30] sm:$0xff]
        %v454 = vld [vmem:[#allocation3 + $0x38] sm:$0xff]
        %455 = vadd.xlane.f32.xlu0 %v358
        %v456 = vpop.xlane.xlu0 %455
        %457 = vadd.xlane.f32.xlu0 %v359
        %v458 = vpop.xlane.xlu0 %457
        %459 = vadd.xlane.f32.xlu0 %v360
        %v460 = vpop.xlane.xlu0 %459
        %461 = vadd.xlane.f32.xlu0 %v361
        %v462 = vpop.xlane.xlu0 %461
        %463 = vadd.xlane.f32.xlu0 %v362
        %v464 = vpop.xlane.xlu0 %463
        %465 = vadd.xlane.f32.xlu0 %v363
        %v466 = vpop.xlane.xlu0 %465
        %467 = vadd.xlane.f32.xlu0 %v364
        %v468 = vpop.xlane.xlu0 %467
        %469 = vadd.xlane.f32.xlu0 %v365
        %v470 = vpop.xlane.xlu0 %469
        %v471 = vadd.f32 %v447, %v456
        %v472 = vadd.f32 %v448, %v458
        %v473 = vadd.f32 %v449, %v460
        %v474 = vadd.f32 %v450, %v462
        %v475 = vadd.f32 %v451, %v464
        %v476 = vadd.f32 %v452, %v466
        %v477 = vadd.f32 %v453, %v468
        %v478 = vadd.f32 %v454, %v470
        %vm479 = vcmask 7168
        %480 = vst.msk [vmem:[#allocation3] sm:$0xff] %vm479, %v471
        %481 = vst.msk [vmem:[#allocation3 + $0x8] sm:$0xff] %vm479, %v472
        %482 = vst.msk [vmem:[#allocation3 + $0x10] sm:$0xff] %vm479, %v473
        %483 = vst.msk [vmem:[#allocation3 + $0x18] sm:$0xff] %vm479, %v474
        %484 = vst.msk [vmem:[#allocation3 + $0x20] sm:$0xff] %vm479, %v475
        %485 = vst.msk [vmem:[#allocation3 + $0x28] sm:$0xff] %vm479, %v476
        %486 = vst.msk [vmem:[#allocation3 + $0x30] sm:$0xff] %vm479, %v477
        %487 = vst.msk [vmem:[#allocation3 + $0x38] sm:$0xff] %vm479, %v478
        %p488 = scmp.eq.s32.totalorder %s21, 2
        // Predicated region
        $region83: #{gcn_forward.1} parent=73 // pred_check
          %p489 = pneg %p488
        $region84: #{gcn_forward.1} parent=73 // pred_check_branch
          %491 = sbr.rel (%p489) target = $region86
        $region85: #{gcn_forward.1} parent=73 // pred_region
          %v492 = vld [vmem:[#allocation3] sm:$0xff]
          %v493 = vld [vmem:[#allocation3 + $0x8] sm:$0xff]
          %v494 = vld [vmem:[#allocation3 + $0x10] sm:$0xff]
          %v495 = vld [vmem:[#allocation3 + $0x18] sm:$0xff]
          %v496 = vld [vmem:[#allocation3 + $0x20] sm:$0xff]
          %v497 = vld [vmem:[#allocation3 + $0x28] sm:$0xff]
          %v498 = vld [vmem:[#allocation3 + $0x30] sm:$0xff]
          %v499 = vld [vmem:[#allocation3 + $0x38] sm:$0xff]
          %v500 = vmax.f32 %v492, 1.0
          %v501 = vmax.f32 %v493, 1.0
          %v502 = vmax.f32 %v494, 1.0
          %v503 = vmax.f32 %v495, 1.0
          %v504 = vmax.f32 %v496, 1.0
          %v505 = vmax.f32 %v497, 1.0
          %v506 = vmax.f32 %v498, 1.0
          %v507 = vmax.f32 %v499, 1.0
          %v508 = vrcp.pop %v500
          %v509 = vmul.f32 %v500, %v508
          %v510 = vsub.f32 1.0, %v509
          %v511 = vmul.f32 %v508, %v510
          %v512 = vadd.f32 %v508, %v511
          %vm513 = vweird.f32 %v500
          %vm514 = vweird.f32 %v508
          %vm515 = vmor %vm513, %vm514
          %v516 = vsel %vm515, %v508, %v512
          %v517 = vand.u32 2147483647, %v500
          %vm518 = vcmp.eq.f32.partialorder %v517, 8.507059e+37
          %v519 = vand.u32 %v500, 2147483648
          %v520 = vor.u32 1.1754944e-38, %v519
          %v521 = vsel %vm518, %v520, %v516
          %v522 = vmul.f32 1.0, %v521
          %v523 = vrcp.pop %v501
          %v524 = vmul.f32 %v501, %v523
          %v525 = vsub.f32 1.0, %v524
          %v526 = vmul.f32 %v523, %v525
          %v527 = vadd.f32 %v523, %v526
          %vm528 = vweird.f32 %v501
          %vm529 = vweird.f32 %v523
          %vm530 = vmor %vm528, %vm529
          %v531 = vsel %vm530, %v523, %v527
          %v532 = vand.u32 2147483647, %v501
          %vm533 = vcmp.eq.f32.partialorder %v532, 8.507059e+37
          %v534 = vand.u32 %v501, 2147483648
          %v535 = vor.u32 1.1754944e-38, %v534
          %v536 = vsel %vm533, %v535, %v531
          %v537 = vmul.f32 1.0, %v536
          %v538 = vrcp.pop %v502
          %v539 = vmul.f32 %v502, %v538
          %v540 = vsub.f32 1.0, %v539
          %v541 = vmul.f32 %v538, %v540
          %v542 = vadd.f32 %v538, %v541
          %vm543 = vweird.f32 %v502
          %vm544 = vweird.f32 %v538
          %vm545 = vmor %vm543, %vm544
          %v546 = vsel %vm545, %v538, %v542
          %v547 = vand.u32 2147483647, %v502
          %vm548 = vcmp.eq.f32.partialorder %v547, 8.507059e+37
          %v549 = vand.u32 %v502, 2147483648
          %v550 = vor.u32 1.1754944e-38, %v549
          %v551 = vsel %vm548, %v550, %v546
          %v552 = vmul.f32 1.0, %v551
          %v553 = vrcp.pop %v503
          %v554 = vmul.f32 %v503, %v553
          %v555 = vsub.f32 1.0, %v554
          %v556 = vmul.f32 %v553, %v555
          %v557 = vadd.f32 %v553, %v556
          %vm558 = vweird.f32 %v503
          %vm559 = vweird.f32 %v553
          %vm560 = vmor %vm558, %vm559
          %v561 = vsel %vm560, %v553, %v557
          %v562 = vand.u32 2147483647, %v503
          %vm563 = vcmp.eq.f32.partialorder %v562, 8.507059e+37
          %v564 = vand.u32 %v503, 2147483648
          %v565 = vor.u32 1.1754944e-38, %v564
          %v566 = vsel %vm563, %v565, %v561
          %v567 = vmul.f32 1.0, %v566
          %v568 = vrcp.pop %v504
          %v569 = vmul.f32 %v504, %v568
          %v570 = vsub.f32 1.0, %v569
          %v571 = vmul.f32 %v568, %v570
          %v572 = vadd.f32 %v568, %v571
          %vm573 = vweird.f32 %v504
          %vm574 = vweird.f32 %v568
          %vm575 = vmor %vm573, %vm574
          %v576 = vsel %vm575, %v568, %v572
          %v577 = vand.u32 2147483647, %v504
          %vm578 = vcmp.eq.f32.partialorder %v577, 8.507059e+37
          %v579 = vand.u32 %v504, 2147483648
          %v580 = vor.u32 1.1754944e-38, %v579
          %v581 = vsel %vm578, %v580, %v576
          %v582 = vmul.f32 1.0, %v581
          %v583 = vrcp.pop %v505
          %v584 = vmul.f32 %v505, %v583
          %v585 = vsub.f32 1.0, %v584
          %v586 = vmul.f32 %v583, %v585
          %v587 = vadd.f32 %v583, %v586
          %vm588 = vweird.f32 %v505
          %vm589 = vweird.f32 %v583
          %vm590 = vmor %vm588, %vm589
          %v591 = vsel %vm590, %v583, %v587
          %v592 = vand.u32 2147483647, %v505
          %vm593 = vcmp.eq.f32.partialorder %v592, 8.507059e+37
          %v594 = vand.u32 %v505, 2147483648
          %v595 = vor.u32 1.1754944e-38, %v594
          %v596 = vsel %vm593, %v595, %v591
          %v597 = vmul.f32 1.0, %v596
          %v598 = vrcp.pop %v506
          %v599 = vmul.f32 %v506, %v598
          %v600 = vsub.f32 1.0, %v599
          %v601 = vmul.f32 %v598, %v600
          %v602 = vadd.f32 %v598, %v601
          %vm603 = vweird.f32 %v506
          %vm604 = vweird.f32 %v598
          %vm605 = vmor %vm603, %vm604
          %v606 = vsel %vm605, %v598, %v602
          %v607 = vand.u32 2147483647, %v506
          %vm608 = vcmp.eq.f32.partialorder %v607, 8.507059e+37
          %v609 = vand.u32 %v506, 2147483648
          %v610 = vor.u32 1.1754944e-38, %v609
          %v611 = vsel %vm608, %v610, %v606
          %v612 = vmul.f32 1.0, %v611
          %v613 = vrcp.pop %v507
          %v614 = vmul.f32 %v507, %v613
          %v615 = vsub.f32 1.0, %v614
          %v616 = vmul.f32 %v613, %v615
          %v617 = vadd.f32 %v613, %v616
          %vm618 = vweird.f32 %v507
          %vm619 = vweird.f32 %v613
          %vm620 = vmor %vm618, %vm619
          %v621 = vsel %vm620, %v613, %v617
          %v622 = vand.u32 2147483647, %v507
          %vm623 = vcmp.eq.f32.partialorder %v622, 8.507059e+37
          %v624 = vand.u32 %v507, 2147483648
          %v625 = vor.u32 1.1754944e-38, %v624
          %v626 = vsel %vm623, %v625, %v621
          %v627 = vmul.f32 1.0, %v626
          %vm628 = vcmp.gt.f32.partialorder %v492, 0.0
          %vm629 = vcmp.gt.f32.partialorder %v493, 0.0
          %vm630 = vcmp.gt.f32.partialorder %v494, 0.0
          %vm631 = vcmp.gt.f32.partialorder %v495, 0.0
          %vm632 = vcmp.gt.f32.partialorder %v496, 0.0
          %vm633 = vcmp.gt.f32.partialorder %v497, 0.0
          %vm634 = vcmp.gt.f32.partialorder %v498, 0.0
          %vm635 = vcmp.gt.f32.partialorder %v499, 0.0
          %v636 = vld [vmem:[#allocation2] sm:$0xff]
          %v637 = vld [vmem:[#allocation2 + $0x8] sm:$0xff]
          %v638 = vld [vmem:[#allocation2 + $0x10] sm:$0xff]
          %v639 = vld [vmem:[#allocation2 + $0x18] sm:$0xff]
          %v640 = vld [vmem:[#allocation2 + $0x20] sm:$0xff]
          %v641 = vld [vmem:[#allocation2 + $0x28] sm:$0xff]
          %v642 = vld [vmem:[#allocation2 + $0x30] sm:$0xff]
          %v643 = vld [vmem:[#allocation2 + $0x38] sm:$0xff]
          %645 = vset.pattern.permute.xlu0 0
          %646 = vperm.xlu0 %645, %v522
          %v647 = vpop.permute.xlu0 %646
          %650 = vset.pattern.permute.xlu0 0
          %651 = vperm.xlu0 %650, %v537
          %v652 = vpop.permute.xlu0 %651
          %655 = vset.pattern.permute.xlu0 0
          %656 = vperm.xlu0 %655, %v552
          %v657 = vpop.permute.xlu0 %656
          %660 = vset.pattern.permute.xlu0 0
          %661 = vperm.xlu0 %660, %v567
          %v662 = vpop.permute.xlu0 %661
          %665 = vset.pattern.permute.xlu0 0
          %666 = vperm.xlu0 %665, %v582
          %v667 = vpop.permute.xlu0 %666
          %670 = vset.pattern.permute.xlu0 0
          %671 = vperm.xlu0 %670, %v597
          %v672 = vpop.permute.xlu0 %671
          %675 = vset.pattern.permute.xlu0 0
          %676 = vperm.xlu0 %675, %v612
          %v677 = vpop.permute.xlu0 %676
          %680 = vset.pattern.permute.xlu0 0
          %681 = vperm.xlu0 %680, %v627
          %v682 = vpop.permute.xlu0 %681
          %v684 = vmul.f32 %v636, %v647
          %v685 = vmul.f32 %v637, %v652
          %v686 = vmul.f32 %v638, %v657
          %v687 = vmul.f32 %v639, %v662
          %v688 = vmul.f32 %v640, %v667
          %v689 = vmul.f32 %v641, %v672
          %v690 = vmul.f32 %v642, %v677
          %v691 = vmul.f32 %v643, %v682
          %v692 = vld [vmem:[%s319] sm:$0xff]
          %v693 = vld [vmem:[%s319 + $0x8] sm:$0xff]
          %v694 = vld [vmem:[%s319 + $0x10] sm:$0xff]
          %v695 = vld [vmem:[%s319 + $0x18] sm:$0xff]
          %v696 = vld [vmem:[%s319 + $0x20] sm:$0xff]
          %v697 = vld [vmem:[%s319 + $0x28] sm:$0xff]
          %v698 = vld [vmem:[%s319 + $0x30] sm:$0xff]
          %v699 = vld [vmem:[%s319 + $0x38] sm:$0xff]
          %v700 = vsel %vm628, 1, 0
          %v701 = vsel %vm629, 1, 0
          %v702 = vsel %vm630, 1, 0
          %v703 = vsel %vm631, 1, 0
          %v704 = vsel %vm632, 1, 0
          %v705 = vsel %vm633, 1, 0
          %v706 = vsel %vm634, 1, 0
          %v707 = vsel %vm635, 1, 0
          %708 = vset.pattern.permute.xlu0 0
          %709 = vperm.xlu0 %708, %v700
          %v710 = vpop.permute.xlu0 %709
          %711 = vset.pattern.permute.xlu0 0
          %712 = vperm.xlu0 %711, %v701
          %v713 = vpop.permute.xlu0 %712
          %714 = vset.pattern.permute.xlu0 0
          %715 = vperm.xlu0 %714, %v702
          %v716 = vpop.permute.xlu0 %715
          %717 = vset.pattern.permute.xlu0 0
          %718 = vperm.xlu0 %717, %v703
          %v719 = vpop.permute.xlu0 %718
          %720 = vset.pattern.permute.xlu0 0
          %721 = vperm.xlu0 %720, %v704
          %v722 = vpop.permute.xlu0 %721
          %723 = vset.pattern.permute.xlu0 0
          %724 = vperm.xlu0 %723, %v705
          %v725 = vpop.permute.xlu0 %724
          %726 = vset.pattern.permute.xlu0 0
          %727 = vperm.xlu0 %726, %v706
          %v728 = vpop.permute.xlu0 %727
          %729 = vset.pattern.permute.xlu0 0
          %730 = vperm.xlu0 %729, %v707
          %v731 = vpop.permute.xlu0 %730
          %vm732 = vcmp.eq.s32.totalorder %v710, 1
          %vm733 = vcmp.eq.s32.totalorder %v713, 1
          %vm734 = vcmp.eq.s32.totalorder %v716, 1
          %vm735 = vcmp.eq.s32.totalorder %v719, 1
          %vm736 = vcmp.eq.s32.totalorder %v722, 1
          %vm737 = vcmp.eq.s32.totalorder %v725, 1
          %vm738 = vcmp.eq.s32.totalorder %v728, 1
          %vm739 = vcmp.eq.s32.totalorder %v731, 1
          %v740 = vsel %vm732, %v684, %v692
          %v741 = vsel %vm733, %v685, %v693
          %v742 = vsel %vm734, %v686, %v694
          %v743 = vsel %vm735, %v687, %v695
          %v744 = vsel %vm736, %v688, %v696
          %v745 = vsel %vm737, %v689, %v697
          %v746 = vsel %vm738, %v690, %v698
          %v747 = vsel %vm739, %v691, %v699
          %v748 = vld [vmem:[%s3] sm:$0xff]
          %v749 = vld [vmem:[%s3 + $0x8] sm:$0xff]
          %v750 = vld [vmem:[%s3 + $0x10] sm:$0xff]
          %v751 = vld [vmem:[%s3 + $0x18] sm:$0xff]
          %v752 = vld [vmem:[%s3 + $0x20] sm:$0xff]
          %v753 = vld [vmem:[%s3 + $0x28] sm:$0xff]
          %v754 = vld [vmem:[%s3 + $0x30] sm:$0xff]
          %v755 = vld [vmem:[%s3 + $0x38] sm:$0xff]
          %v756 = vld [vmem:[%s3 + $0x40] sm:$0xff]
          %v757 = vld [vmem:[%s3 + $0x48] sm:$0xff]
          %v758 = vld [vmem:[%s3 + $0x50] sm:$0xff]
          %v759 = vld [vmem:[%s3 + $0x58] sm:$0xff]
          %v760 = vld [vmem:[%s3 + $0x60] sm:$0xff]
          %v761 = vld [vmem:[%s3 + $0x68] sm:$0xff]
          %v762 = vld [vmem:[%s3 + $0x70] sm:$0xff]
          %v763 = vld [vmem:[%s3 + $0x78] sm:$0xff]
          %v764 = vld [vmem:[%s4] sm:$0x1]
          %v766 = vperm.slane %v764, 0
          %768 = vmatpush.msra.mxu0 %v763
          %769 = vmatpush.msra.mxu0 %v762
          %770 = vmatpush.msra.mxu0 %v761
          %771 = vmatpush.msra.mxu0 %v760
          %772 = vmatpush.msra.mxu0 %v759
          %773 = vmatpush.msra.mxu0 %v758
          %774 = vmatpush.msra.mxu0 %v757
          %775 = vmatpush.msra.mxu0 %v756
          %776 = vmatpush.msra.mxu0 %v755
          %777 = vmatpush.msra.mxu0 %v754
          %778 = vmatpush.msra.mxu0 %v753
          %779 = vmatpush.msra.mxu0 %v752
          %780 = vmatpush.msra.mxu0 %v751
          %781 = vmatpush.msra.mxu0 %v750
          %782 = vmatpush.msra.mxu0 %v749
          %783 = vmatpush.msra.mxu0 %v748
          %784 = vmatmul.f32.gmra.mxu0 %v740
          %v785 = vpop.f32.mrf.mxu0
          %v786 = vadd.f32 %v766, %v785
          %787 = vmatmul.f32.gmra.mxu0 %v741
          %v788 = vpop.f32.mrf.mxu0
          %v789 = vadd.f32 %v766, %v788
          %790 = vmatmul.f32.gmra.mxu0 %v742
          %v791 = vpop.f32.mrf.mxu0
          %v792 = vadd.f32 %v766, %v791
          %793 = vmatmul.f32.gmra.mxu0 %v743
          %v794 = vpop.f32.mrf.mxu0
          %v795 = vadd.f32 %v766, %v794
          %796 = vmatmul.f32.gmra.mxu0 %v744
          %v797 = vpop.f32.mrf.mxu0
          %v798 = vadd.f32 %v766, %v797
          %799 = vmatmul.f32.gmra.mxu0 %v745
          %v800 = vpop.f32.mrf.mxu0
          %v801 = vadd.f32 %v766, %v800
          %802 = vmatmul.f32.gmra.mxu0 %v746
          %v803 = vpop.f32.mrf.mxu0
          %v804 = vadd.f32 %v766, %v803
          %805 = vmatmul.f32.gmra.mxu0 %v747
          %v806 = vpop.f32.mrf.mxu0
          %v807 = vadd.f32 %v766, %v806
          %808 = vdwg.mxu0
          %v809 = vmax.f32 %v786, 0.0
          %v810 = vmax.f32 %v789, 0.0
          %v811 = vmax.f32 %v792, 0.0
          %v812 = vmax.f32 %v795, 0.0
          %v813 = vmax.f32 %v798, 0.0
          %v814 = vmax.f32 %v801, 0.0
          %v815 = vmax.f32 %v804, 0.0
          %v816 = vmax.f32 %v807, 0.0
          %817 = vst [vmem:[%s325] sm:$0xff] %v809
          %818 = vst [vmem:[%s325 + $0x8] sm:$0xff] %v810
          %819 = vst [vmem:[%s325 + $0x10] sm:$0xff] %v811
          %820 = vst [vmem:[%s325 + $0x18] sm:$0xff] %v812
          %821 = vst [vmem:[%s325 + $0x20] sm:$0xff] %v813
          %822 = vst [vmem:[%s325 + $0x28] sm:$0xff] %v814
          %823 = vst [vmem:[%s325 + $0x30] sm:$0xff] %v815
          %824 = vst [vmem:[%s325 + $0x38] sm:$0xff] %v816
        $region86: #{gcn_forward.1} parent=73 // pred_fallthru
          _
        %s825 = smul.u32 8, %s20
        %p826 = scmp.lt.s32.totalorder %s825, 47
        %s827 = scalar_select %p826, %s825, 47
        %s828 = smul.addr %s827, 8
        %s829 = scalar_lea.vmem %s5, %s828
        // Predicated region
        $region87: #{gcn_forward.1} parent=73 // pred_check
          %p830 = pneg %p168
        $region88: #{gcn_forward.1} parent=73 // pred_check_branch
          %832 = sbr.rel (%p830) target = $region90
        $region89: #{gcn_forward.1} parent=73 // pred_region
          %s833 = smul.u32 8, %s20
        $region90: #{gcn_forward.1} parent=73 // pred_fallthru
          _
      $region74: #{gcn_forward.1} parent=5 // pred_fallthru
        _
      %p834 = scmp.le.s32.totalorder 2, %s11
      // Predicated region
      $region91: #{gcn_forward.1} parent=5 // pred_check
        %p835 = pneg %p834
      $region92: #{gcn_forward.1} parent=5 // pred_check_branch
        %837 = sbr.rel (%p835) target = $region94
      $region93: #{gcn_forward.1} parent=5 // pred_region
        %s838 = ssub.s32 %s11, 2
        // Predicated region
        $region95: #{gcn_forward.1} parent=93 // pred_check
          %p839 = pneg %p174
        $region96: #{gcn_forward.1} parent=93 // pred_check_branch
          %841 = sbr.rel (%p839) target = $region98
        $region97: #{gcn_forward.1} parent=93 // pred_region
          %s842 = smul.u32 8, %s22
          %p843 = scmp.lt.s32.totalorder %s842, 47
          %s844 = scalar_select %p843, %s842, 47
          %s845 = smul.addr %s844, 8
          %s846 = scalar_lea.vmem %s5, %s845
        $region98: #{gcn_forward.1} parent=93 // pred_fallthru
          _
      $region94: #{gcn_forward.1} parent=5 // pred_fallthru
        _
    $region6: #{gcn_forward.1} parent=1 // loop_footer
      %s15 = sadd.s32 1, %s11
    $region7: #{gcn_forward.1} parent=1 // loop_footer_branch
      %10 = sbr.rel target = $region3
    $region8: #{gcn_forward.1} parent=1 // loop_exit
      _

</llo_original>
